<compile_context>
chip_gen: v7x
topology: tpu7x:2x2x1
jax: 0.10.0
libtpu: 0.0.40
codegen_flags: <defaults>
</compile_context>

<pallas_src>
import math

import numpy as np
import jax
import jax.numpy as jnp
from jax.experimental import pallas as pl
from jax.experimental.pallas import tpu as pltpu


# ----------------------------------------------------------------------------
# Filter construction (mirrors torchaudio._get_sinc_resample_kernel, hann window)
# ----------------------------------------------------------------------------
def sinc_resample_kernel(orig_freq, new_freq, gcd, lowpass_filter_width=6, rolloff=0.99):
    """Returns (kernel[new, K] float32, width). Matches torchaudio defaults."""
    orig = orig_freq // gcd
    new = new_freq // gcd
    base_freq = min(orig, new) * rolloff
    width = int(math.ceil(lowpass_filter_width * orig / base_freq))

    idx = np.arange(-width, width + orig, dtype=np.float64)[None, :] / orig   # (1, K)
    t = np.arange(0, -new, -1, dtype=np.float64)[:, None] / new + idx          # (new, K)
    t = t * base_freq
    t = np.clip(t, -lowpass_filter_width, lowpass_filter_width)
    window = np.cos(t * math.pi / lowpass_filter_width / 2.0) ** 2
    # TODO(synk): only the default "sinc_interp_hann" window is implemented (no kaiser).
    t = t * math.pi
    scale = base_freq / orig
    safe_t = np.where(t == 0.0, 1.0, t)
    kernels = np.where(t == 0.0, 1.0, np.sin(safe_t) / safe_t)
    kernels = kernels * window * scale
    return kernels.astype(np.float32), width


# ----------------------------------------------------------------------------
# Pallas polyphase resample
# ----------------------------------------------------------------------------
_HALO = 128      # lane-aligned halo block (only Kq-1 columns are actually used)
_MAX_TF = 2048   # frames per grid step (lane axis of every block)


def _round_up(x, m):
    return -(-x // m) * m


def resample_pallas(waveform, kernel_np, orig, new, width):
    """waveform (..., L) float -> (..., ceil(new*L/orig)) polyphase sinc resample."""
    in_shape = waveform.shape
    L = int(in_shape[-1])
    wav2d = waveform.reshape(-1, L).astype(jnp.float32)       # pack batch/channels
    B = wav2d.shape[0]

    K = kernel_np.shape[1]                                    # 2*width + orig taps
    Kq = -(-K // orig)                                        # frame-shift groups after de-interleave
    assert Kq - 1 <= _HALO, (
        f"tap groups per frame (Kq={Kq}) exceed the {_HALO}-column halo; "
        "grow _HALO for this resampling ratio")
    F = L // orig + 1                                         # conv1d (stride=orig) output frames

    # frames per block: lane-dense multiple of 128; aim for >= 2 blocks (v7x has 2 TCs)
    TF = min(_MAX_TF, max(_HALO, _round_up(pl.cdiv(F, 2), _HALO)))
    n_blk = pl.cdiv(F, TF)

    R = B * orig
    Rp = _round_up(R, 8)                                      # sublane-aligned row count
    NBp = _round_up(new * B, 8)                               # sublane-aligned output rows

    # --- de-interleave time: A[b*orig + r, f] = padded[b, f*orig + r]  (frames on lanes)
    F_cols = n_blk * TF + _HALO                               # only one extra 128-col halo strip
    Lp = F_cols * orig
    padded = jnp.pad(wav2d, ((0, 0), (width, Lp - L - width)))
    A = padded.reshape(B, F_cols, orig).transpose(0, 2, 1).reshape(R, F_cols)
    if Rp > R:
        A = jnp.pad(A, ((0, Rp - R), (0, 0)))                 # dead sublane rows are zero

    # --- fused weight matrix (small input, not a baked constant):
    #     wmat[q, p*B + b, b*orig + r] = kernel[p, q*orig + r]
    kpad = np.zeros((new, Kq * orig), np.float32)
    kpad[:, :K] = kernel_np
    wmat_np = np.zeros((Kq, NBp, Rp), np.float32)
    for q in range(Kq):
        for p in range(new):
            for b in range(B):
                wmat_np[q, p * B + b, b * orig:(b + 1) * orig] = kpad[p, q * orig:(q + 1) * orig]
    wmat = jnp.asarray(wmat_np)

    def conv_kernel(w_ref, cur_ref, halo_ref, out_ref):
        # w (Kq, NBp, Rp) | cur (Rp, TF) frame tile | halo (Rp, 128) head of next tile
        # out (NBp, TF): row p*B + b = resampled phase p of batch b, lane-dense frames
        full = jnp.concatenate([cur_ref[...], halo_ref[...]], axis=-1)     # (Rp, TF+128)
        acc = jnp.dot(w_ref[0], full[:, :TF], preferred_element_type=jnp.float32)
        for q in range(1, Kq):            # q-outer: one lane-shifted window per tap group,
            acc = acc + jnp.dot(          # whole tap/phase/row reduction on the MXU
                w_ref[q], full[:, q:q + TF], preferred_element_type=jnp.float32)
        out_ref[...] = acc

    main_kwargs = {}
    if n_blk >= 3:
        main_kwargs["pipeline_mode"] = pl.Buffered(3)         # deeper buffering (helps v5e)

    out = pl.pallas_call(
        conv_kernel,
        out_shape=jax.ShapeDtypeStruct((NBp, n_blk * TF), jnp.float32),
        grid=(n_blk,),
        in_specs=[
            pl.BlockSpec((Kq, NBp, Rp), lambda i: (0, 0, 0)),
            pl.BlockSpec((Rp, TF), lambda i: (0, i), **main_kwargs),
            # halo = first 128 columns of tile i+1, read straight from A (passed twice)
            pl.BlockSpec((Rp, _HALO), lambda i: (0, i * (TF // _HALO) + TF // _HALO)),
        ],
        out_specs=pl.BlockSpec((NBp, TF), lambda i: (0, i)),
        compiler_params=pltpu.CompilerParams(dimension_semantics=("parallel",)),
    )(wmat, A, A)

    # interleave phases like torch: rows p*B+b -> (new, B, F) -> (B, F, new) -> (B, F*new)
    res = out[:new * B, :F].reshape(new, B, F)
    res = jnp.transpose(res, (1, 2, 0)).reshape(B, F * new)
    target_length = int(math.ceil(new * L / orig))
    res = res[:, :target_length].astype(waveform.dtype)
    return res.reshape(in_shape[:-1] + (target_length,))


# ----------------------------------------------------------------------------
# Module equivalent
# ----------------------------------------------------------------------------
class ResamplerPallas:
    def __init__(self, hubert_config, mel_config):
        self.hop_size = mel_config["hop_length"]
        self.orig_freq = mel_config["sample_rate"]
        self.new_freq = hubert_config["sample_rate"]
        g = math.gcd(self.orig_freq, self.new_freq)
        self.orig = self.orig_freq // g
        self.new = self.new_freq // g
        if self.orig_freq != self.new_freq:
            self.kernel, self.width = sinc_resample_kernel(self.orig_freq, self.new_freq, g)
        else:
            self.kernel, self.width = None, 0

    def __call__(self, waveform):
        n_frames = waveform.shape[-1] // self.hop_size + 1
        if self.orig_freq == self.new_freq:
            return waveform, n_frames          # torchaudio returns the input unchanged
        resampled = resample_pallas(waveform, self.kernel, self.orig, self.new, self.width)
        return resampled, n_frames


# ----------------------------------------------------------------------------
# Pure-numpy reference (direct strided conv) for correctness check
# ----------------------------------------------------------------------------
def numpy_reference(waveform, kernel, orig, new, width):
    B, L = waveform.shape
    K = kernel.shape[1]
    wp = np.pad(waveform, ((0, 0), (width, width + orig)))
    F = L // orig + 1
    out = np.zeros((B, F, new), np.float32)
    for f in range(F):
        win = wp[:, f * orig: f * orig + K]                   # (B, K)
        out[:, f, :] = win @ kernel.T
    res = out.reshape(B, F * new)
    return res[:, : int(math.ceil(new * L / orig))]


if __name__ == "__main__":
    hubert_config = {"sample_rate": 16000}
    mel_config = {"sample_rate": 24000, "hop_length": 16}

    model = ResamplerPallas(hubert_config, mel_config)

    key = jax.random.PRNGKey(0)
    waveform = jax.random.normal(key, (2, 96), dtype=jnp.float32)   # (batch, time)

    resampled, n_frames = model(waveform)
    resampled = jax.block_until_ready(resampled)

    # checks
    assert n_frames == 96 // 16 + 1
    ref = numpy_reference(np.asarray(waveform), model.kernel, model.orig,
                          model.new, model.width)
    assert resampled.shape == ref.shape, (resampled.shape, ref.shape)
    np.testing.assert_allclose(np.asarray(resampled), ref, rtol=1e-4, atol=1e-4)

    print("KERNEL_OK")
</pallas_src>

<mosaic_0001>
module attributes {stable_mosaic.version = 11 : i64} {
  func.func @conv_kernel(%arg0: i32, %arg1: memref<8x8x8xf32, #tpu.memory_space<vmem>>, %arg2: memref<8x128xf32, #tpu.memory_space<vmem>>, %arg3: memref<8x128xf32, #tpu.memory_space<vmem>>, %arg4: memref<8x128xf32, #tpu.memory_space<vmem>>) attributes {dimension_semantics = [#tpu.dimension_semantics<parallel>], iteration_bounds = array<i64: 1>, scalar_prefetch = 0 : i64, scratch_operands = 0 : i64, tpu.core_type = #tpu.core_type<tc>, window_params = [{pipeline_mode = #tpu.pipeline_mode<synchronous>, transform_indices = @transform_0, window_bounds = array<i64: 8, 8, 8>}, {transform_indices = @transform_1, window_bounds = array<i64: 8, 128>}, {transform_indices = @transform_2, window_bounds = array<i64: 8, 128>}, {transform_indices = @transform_3, window_bounds = array<i64: 8, 128>}]} {
    %c0 = arith.constant 0 : index
    %c0_0 = arith.constant 0 : index
    %0 = vector.load %arg2[%c0, %c0_0] : memref<8x128xf32, #tpu.memory_space<vmem>>, vector<8x128xf32>
    %c0_1 = arith.constant 0 : index
    %c0_2 = arith.constant 0 : index
    %1 = vector.load %arg3[%c0_1, %c0_2] : memref<8x128xf32, #tpu.memory_space<vmem>>, vector<8x128xf32>
    %2 = tpu.concatenate %0, %1 in 1 : vector<8x128xf32>, vector<8x128xf32> -> vector<8x256xf32>
    %c0_3 = arith.constant 0 : index
    %c0_4 = arith.constant 0 : index
    %c0_5 = arith.constant 0 : index
    %3 = vector.load %arg1[%c0_3, %c0_4, %c0_5] : memref<8x8x8xf32, #tpu.memory_space<vmem>>, vector<1x8x8xf32>
    %4 = vector.shape_cast %3 : vector<1x8x8xf32> to vector<8x8xf32>
    %5 = vector.extract_strided_slice %2 {offsets = [0, 0], sizes = [8, 128], strides = [1, 1]} : vector<8x256xf32> to vector<8x128xf32>
    %cst = arith.constant dense<0.000000e+00> : vector<8x128xf32>
    %6 = tpu.matmul %4, %5, %cst {dimension_numbers = #tpu.dot_dimension_numbers<[1], [0], [0], [1], [0, 0, 1, 1], [], []>} : vector<8x8xf32>, vector<8x128xf32>, vector<8x128xf32> -> vector<8x128xf32>
    %c1 = arith.constant 1 : index
    %c0_6 = arith.constant 0 : index
    %c0_7 = arith.constant 0 : index
    %7 = vector.load %arg1[%c1, %c0_6, %c0_7] : memref<8x8x8xf32, #tpu.memory_space<vmem>>, vector<1x8x8xf32>
    %8 = vector.shape_cast %7 : vector<1x8x8xf32> to vector<8x8xf32>
    %9 = vector.extract_strided_slice %2 {offsets = [0, 1], sizes = [8, 128], strides = [1, 1]} : vector<8x256xf32> to vector<8x128xf32>
    %cst_8 = arith.constant dense<0.000000e+00> : vector<8x128xf32>
    %10 = tpu.matmul %8, %9, %cst_8 {dimension_numbers = #tpu.dot_dimension_numbers<[1], [0], [0], [1], [0, 0, 1, 1], [], []>} : vector<8x8xf32>, vector<8x128xf32>, vector<8x128xf32> -> vector<8x128xf32>
    %11 = arith.addf %6, %10 : vector<8x128xf32>
    %c2 = arith.constant 2 : index
    %c0_9 = arith.constant 0 : index
    %c0_10 = arith.constant 0 : index
    %12 = vector.load %arg1[%c2, %c0_9, %c0_10] : memref<8x8x8xf32, #tpu.memory_space<vmem>>, vector<1x8x8xf32>
    %13 = vector.shape_cast %12 : vector<1x8x8xf32> to vector<8x8xf32>
    %14 = vector.extract_strided_slice %2 {offsets = [0, 2], sizes = [8, 128], strides = [1, 1]} : vector<8x256xf32> to vector<8x128xf32>
    %cst_11 = arith.constant dense<0.000000e+00> : vector<8x128xf32>
    %15 = tpu.matmul %13, %14, %cst_11 {dimension_numbers = #tpu.dot_dimension_numbers<[1], [0], [0], [1], [0, 0, 1, 1], [], []>} : vector<8x8xf32>, vector<8x128xf32>, vector<8x128xf32> -> vector<8x128xf32>
    %16 = arith.addf %11, %15 : vector<8x128xf32>
    %c3 = arith.constant 3 : index
    %c0_12 = arith.constant 0 : index
    %c0_13 = arith.constant 0 : index
    %17 = vector.load %arg1[%c3, %c0_12, %c0_13] : memref<8x8x8xf32, #tpu.memory_space<vmem>>, vector<1x8x8xf32>
    %18 = vector.shape_cast %17 : vector<1x8x8xf32> to vector<8x8xf32>
    %19 = vector.extract_strided_slice %2 {offsets = [0, 3], sizes = [8, 128], strides = [1, 1]} : vector<8x256xf32> to vector<8x128xf32>
    %cst_14 = arith.constant dense<0.000000e+00> : vector<8x128xf32>
    %20 = tpu.matmul %18, %19, %cst_14 {dimension_numbers = #tpu.dot_dimension_numbers<[1], [0], [0], [1], [0, 0, 1, 1], [], []>} : vector<8x8xf32>, vector<8x128xf32>, vector<8x128xf32> -> vector<8x128xf32>
    %21 = arith.addf %16, %20 : vector<8x128xf32>
    %c4 = arith.constant 4 : index
    %c0_15 = arith.constant 0 : index
    %c0_16 = arith.constant 0 : index
    %22 = vector.load %arg1[%c4, %c0_15, %c0_16] : memref<8x8x8xf32, #tpu.memory_space<vmem>>, vector<1x8x8xf32>
    %23 = vector.shape_cast %22 : vector<1x8x8xf32> to vector<8x8xf32>
    %24 = vector.extract_strided_slice %2 {offsets = [0, 4], sizes = [8, 128], strides = [1, 1]} : vector<8x256xf32> to vector<8x128xf32>
    %cst_17 = arith.constant dense<0.000000e+00> : vector<8x128xf32>
    %25 = tpu.matmul %23, %24, %cst_17 {dimension_numbers = #tpu.dot_dimension_numbers<[1], [0], [0], [1], [0, 0, 1, 1], [], []>} : vector<8x8xf32>, vector<8x128xf32>, vector<8x128xf32> -> vector<8x128xf32>
    %26 = arith.addf %21, %25 : vector<8x128xf32>
    %c5 = arith.constant 5 : index
    %c0_18 = arith.constant 0 : index
    %c0_19 = arith.constant 0 : index
    %27 = vector.load %arg1[%c5, %c0_18, %c0_19] : memref<8x8x8xf32, #tpu.memory_space<vmem>>, vector<1x8x8xf32>
    %28 = vector.shape_cast %27 : vector<1x8x8xf32> to vector<8x8xf32>
    %29 = vector.extract_strided_slice %2 {offsets = [0, 5], sizes = [8, 128], strides = [1, 1]} : vector<8x256xf32> to vector<8x128xf32>
    %cst_20 = arith.constant dense<0.000000e+00> : vector<8x128xf32>
    %30 = tpu.matmul %28, %29, %cst_20 {dimension_numbers = #tpu.dot_dimension_numbers<[1], [0], [0], [1], [0, 0, 1, 1], [], []>} : vector<8x8xf32>, vector<8x128xf32>, vector<8x128xf32> -> vector<8x128xf32>
    %31 = arith.addf %26, %30 : vector<8x128xf32>
    %c6 = arith.constant 6 : index
    %c0_21 = arith.constant 0 : index
    %c0_22 = arith.constant 0 : index
    %32 = vector.load %arg1[%c6, %c0_21, %c0_22] : memref<8x8x8xf32, #tpu.memory_space<vmem>>, vector<1x8x8xf32>
    %33 = vector.shape_cast %32 : vector<1x8x8xf32> to vector<8x8xf32>
    %34 = vector.extract_strided_slice %2 {offsets = [0, 6], sizes = [8, 128], strides = [1, 1]} : vector<8x256xf32> to vector<8x128xf32>
    %cst_23 = arith.constant dense<0.000000e+00> : vector<8x128xf32>
    %35 = tpu.matmul %33, %34, %cst_23 {dimension_numbers = #tpu.dot_dimension_numbers<[1], [0], [0], [1], [0, 0, 1, 1], [], []>} : vector<8x8xf32>, vector<8x128xf32>, vector<8x128xf32> -> vector<8x128xf32>
    %36 = arith.addf %31, %35 : vector<8x128xf32>
    %c7 = arith.constant 7 : index
    %c0_24 = arith.constant 0 : index
    %c0_25 = arith.constant 0 : index
    %37 = vector.load %arg1[%c7, %c0_24, %c0_25] : memref<8x8x8xf32, #tpu.memory_space<vmem>>, vector<1x8x8xf32>
    %38 = vector.shape_cast %37 : vector<1x8x8xf32> to vector<8x8xf32>
    %39 = vector.extract_strided_slice %2 {offsets = [0, 7], sizes = [8, 128], strides = [1, 1]} : vector<8x256xf32> to vector<8x128xf32>
    %cst_26 = arith.constant dense<0.000000e+00> : vector<8x128xf32>
    %40 = tpu.matmul %38, %39, %cst_26 {dimension_numbers = #tpu.dot_dimension_numbers<[1], [0], [0], [1], [0, 0, 1, 1], [], []>} : vector<8x8xf32>, vector<8x128xf32>, vector<8x128xf32> -> vector<8x128xf32>
    %41 = arith.addf %36, %40 : vector<8x128xf32>
    %c0_27 = arith.constant 0 : index
    %c0_28 = arith.constant 0 : index
    %42 = vector.load %arg4[%c0_27, %c0_28] : memref<8x128xf32, #tpu.memory_space<vmem>>, vector<8x128xf32>
    tpu.vector_store %arg4[%c0_27, %c0_28], %41 {strides = array<i32>} : memref<8x128xf32, #tpu.memory_space<vmem>>, vector<8x128xf32>,
    return
  }
  func.func @transform_0(%arg0: i32) -> (i32, i32, i32) {
    %c0_i32 = arith.constant 0 : i32
    %c0_i32_0 = arith.constant 0 : i32
    %c0_i32_1 = arith.constant 0 : i32
    %c0_i32_2 = arith.constant 0 : i32
    return %c0_i32, %c0_i32_0, %c0_i32_1 : i32, i32, i32
  }
  func.func @transform_1(%arg0: i32) -> (i32, i32) {
    %c0_i32 = arith.constant 0 : i32
    %c0_i32_0 = arith.constant 0 : i32
    return %c0_i32, %arg0 : i32, i32
  }
  func.func @transform_2(%arg0: i32) -> (i32, i32) {
    %c1_i32 = arith.constant 1 : i32
    %0 = arith.muli %arg0, %c1_i32 : i32
    %c1_i32_0 = arith.constant 1 : i32
    %1 = arith.addi %0, %c1_i32_0 : i32
    %c0_i32 = arith.constant 0 : i32
    %c0_i32_1 = arith.constant 0 : i32
    return %c0_i32, %1 : i32, i32
  }
  func.func @transform_3(%arg0: i32) -> (i32, i32) {
    %c0_i32 = arith.constant 0 : i32
    %c0_i32_0 = arith.constant 0 : i32
    return %c0_i32, %arg0 : i32, i32
  }
}

</mosaic_0001>

<llo_original>
// kernel: tpu_custom_call.1
$region0: #{tpu_custom_call.1}
  #allocation0 [shape = 'u32[]', space=smem, size = 0x4, offset = 0x4, fixed_abs, tag = 'smem constant byte address 0x4 - core index']
  #allocation1 [shape = 'u32[144,128]{1,0:T(1,128)}', space=vmem, size = 0x12000, scoped, tag = 'internal scratch']
  %s0 = inlined_call_operand.hbm [shape: f32[8,8,8], index: 0, kind: input, shape index: {}]
  %s1 = inlined_call_operand.hbm [shape: f32[8,256], index: 1, kind: input, shape index: {}]
  %s2 = inlined_call_operand.hbm [shape: f32[8,256], index: 2, kind: input, shape index: {}]
  %s3 = inlined_call_operand.hbm [shape: f32[8,128], index: 3, kind: output, shape index: {}]
  %s4 = sld [smem:[#allocation0]]
  $region34: #{tpu_custom_call.1} parent=0
    _
  %s6 = ssub.s32 1, %s4
  %s7 = scalar_select 0, %s6, %s4
  $region1: #{tpu_custom_call.1} parent=0
    #allocation2 [shape = 'u8[32768]{0}', space=vmem, size = 0x8000, scoped, tag = 'input window, operand 0, single buffered']
    #allocation3 [shape = 's32[1]{0}', space=sflag, size = 0x4, scoped, tag = 'scoped memory for tpu_custom_call.1']
    #allocation4 [shape = 's32[1]{0}', space=sflag, size = 0x4, scoped, tag = 'scoped memory for tpu_custom_call.1']
    #allocation5 [shape = 'u8[4096]{0}', space=vmem, size = 0x1000, scoped, tag = 'input window, operand 1, single buffered']
    #allocation6 [shape = 's32[1]{0}', space=sflag, size = 0x4, scoped, tag = 'scoped memory for tpu_custom_call.1']
    #allocation7 [shape = 'u8[4096]{0}', space=vmem, size = 0x1000, scoped, tag = 'input window, operand 2, single buffered']
    #allocation8 [shape = 'u8[4096]{0}', space=vmem, size = 0x1000, scoped, tag = 'output window, operand 0, single buffered']
    %8 = vsyncpa [#allocation3], 0
    %9 = vsyncpa [#allocation6], 0
    %10 = vsyncpa [#allocation4], 0
    // Predicated region
    $region2: #{tpu_custom_call.1} parent=1 // pred_check
      _
    $region3: #{tpu_custom_call.1} parent=1 // pred_check_branch
      %12 = sbr.rel (0) target = $region5
    $region4: #{tpu_custom_call.1} parent=1 // pred_region
      %s14 = ssub.s32 1024, 1024
      %15 = vsyncadd [#allocation3], %s14
      %s16 = sshll.u32 [#allocation2], 4
      %s17 = int_to_ptr.vmem [resolvable:$true] %s16
      %22 = dma.hbm_to_vmem [thread:$0]  %s0, 1024, %s17, [#allocation3], 128, 128, 8
    $region5: #{tpu_custom_call.1} parent=1 // pred_fallthru
      _
    // Predicated region
    $region6: #{tpu_custom_call.1} parent=1 // pred_check
      _
    $region7: #{tpu_custom_call.1} parent=1 // pred_check_branch
      %24 = sbr.rel (0) target = $region9
    $region8: #{tpu_custom_call.1} parent=1 // pred_region
      %s26 = ssub.s32 128, 128
      %27 = vsyncadd [#allocation6], %s26
      %s29 = sshll.u32 [#allocation5], 4
      %s30 = int_to_ptr.vmem [resolvable:$true] %s29
      %32 = dma.hbm_to_vmem [thread:$0]  %s1, 128, %s30, [#allocation6]
    $region9: #{tpu_custom_call.1} parent=1 // pred_fallthru
      _
    // Predicated region
    $region10: #{tpu_custom_call.1} parent=1 // pred_check
      _
    $region11: #{tpu_custom_call.1} parent=1 // pred_check_branch
      %34 = sbr.rel (0) target = $region13
    $region12: #{tpu_custom_call.1} parent=1 // pred_region
      %s35 = sadd.s32 0, 1
      %s37 = ssub.s32 128, 128
      %38 = vsyncadd [#allocation6], %s37
      %s39 = smul.addr %s35, 128
      %s40 = scalar_lea.hbm %s2, %s39
      %s42 = sshll.u32 [#allocation7], 4
      %s43 = int_to_ptr.vmem [resolvable:$true] %s42
      %45 = dma.hbm_to_vmem [thread:$0]  %s40, 128, %s43, [#allocation6]
    $region13: #{tpu_custom_call.1} parent=1 // pred_fallthru
      _
    // Predicated region
    $region14: #{tpu_custom_call.1} parent=1 // pred_check
      _
    $region15: #{tpu_custom_call.1} parent=1 // pred_check_branch
      %47 = sbr.rel (0) target = $region17
    $region16: #{tpu_custom_call.1} parent=1 // pred_region
      %48 = dma.done [#allocation3], 1024
    $region17: #{tpu_custom_call.1} parent=1 // pred_fallthru
      _
    // Predicated region
    $region18: #{tpu_custom_call.1} parent=1 // pred_check
      _
    $region19: #{tpu_custom_call.1} parent=1 // pred_check_branch
      %50 = sbr.rel (0) target = $region21
    $region20: #{tpu_custom_call.1} parent=1 // pred_region
      %51 = dma.done [#allocation6], 128
    $region21: #{tpu_custom_call.1} parent=1 // pred_fallthru
      _
    // Predicated region
    $region22: #{tpu_custom_call.1} parent=1 // pred_check
      _
    $region23: #{tpu_custom_call.1} parent=1 // pred_check_branch
      %53 = sbr.rel (0) target = $region25
    $region24: #{tpu_custom_call.1} parent=1 // pred_region
      %54 = dma.done [#allocation6], 128
    $region25: #{tpu_custom_call.1} parent=1 // pred_fallthru
      _
    %s55 = sadd.s32 0, 1
    %v56 = vld [vmem:[#allocation5] sm:$0xff]
    %v57 = vld [vmem:[#allocation7] sm:$0xff]
    %v58 = vld [vmem:[#allocation2] sm:$0xff]
    %s59 = scalar_lea.vmem [#allocation2], 8
    %v60 = vld [vmem:[%s59] sm:$0xff]
    %63 = vrot.lane.b32.xlu0 %v56, 127
    %v64 = vpop.permute.xlu0 %63
    %65 = vrot.lane.b32.xlu0 %v57, 127
    %v66 = vpop.permute.xlu0 %65
    %vm67 = vcmask 1039360
    %v68 = vsel %vm67, %v64, %v66
    %vm70 = vcmask 64512
    %v72 = vsel %vm70, %v60, 0
    %74 = vmatprep.subr.mxu0 0.0
    %75 = vmatpush1.msra.mxu0 %v68
    %76 = vmatprep.subr.mxu0 0.0
    %77 = vmatpush1.msra.mxu0 0.0
    %78 = vmatprep.subr.mxu0 0.0
    %79 = vmatpush1.msra.mxu0 0.0
    %80 = vmatprep.subr.mxu0 0.0
    %81 = vmatpush1.msra.mxu0 0.0
    %82 = vmatprep.subr.mxu0 0.0
    %83 = vmatpush1.msra.mxu0 0.0
    %84 = vmatprep.subr.mxu0 0.0
    %85 = vmatpush1.msra.mxu0 0.0
    %86 = vmatprep.subr.mxu0 0.0
    %87 = vmatpush1.msra.mxu0 0.0
    %88 = vmatprep.subr.mxu0 0.0
    %89 = vmatpush1.msra.mxu0 0.0
    %90 = vmatprep.subr.mxu0 0.0
    %91 = vmatpush1.msra.mxu0 0.0
    %92 = vmatprep.subr.mxu0 0.0
    %93 = vmatpush1.msra.mxu0 0.0
    %94 = vmatprep.subr.mxu0 0.0
    %95 = vmatpush1.msra.mxu0 0.0
    %96 = vmatprep.subr.mxu0 0.0
    %97 = vmatpush1.msra.mxu0 0.0
    %98 = vmatprep.subr.mxu0 0.0
    %99 = vmatpush1.msra.mxu0 0.0
    %100 = vmatprep.subr.mxu0 0.0
    %101 = vmatpush1.msra.mxu0 0.0
    %102 = vmatprep.subr.mxu0 0.0
    %103 = vmatpush1.msra.mxu0 0.0
    %104 = vmatprep.subr.mxu0 0.0
    %105 = vmatpush1.msra.mxu0 0.0
    %106 = vmatprep.subr.mxu0 0.0
    %107 = vmatpush1.msra.mxu0 0.0
    %108 = vmatprep.subr.mxu0 0.0
    %109 = vmatpush1.msra.mxu0 0.0
    %110 = vmatprep.subr.mxu0 0.0
    %111 = vmatpush1.msra.mxu0 0.0
    %112 = vmatprep.subr.mxu0 0.0
    %113 = vmatpush1.msra.mxu0 0.0
    %114 = vmatprep.subr.mxu0 0.0
    %115 = vmatpush1.msra.mxu0 0.0
    %116 = vmatprep.subr.mxu0 0.0
    %117 = vmatpush1.msra.mxu0 0.0
    %118 = vmatprep.subr.mxu0 0.0
    %119 = vmatpush1.msra.mxu0 0.0
    %120 = vmatprep.subr.mxu0 0.0
    %121 = vmatpush1.msra.mxu0 0.0
    %122 = vmatprep.subr.mxu0 0.0
    %123 = vmatpush1.msra.mxu0 0.0
    %124 = vmatprep.subr.mxu0 0.0
    %125 = vmatpush1.msra.mxu0 0.0
    %126 = vmatprep.subr.mxu0 0.0
    %127 = vmatpush1.msra.mxu0 0.0
    %128 = vmatprep.subr.mxu0 0.0
    %129 = vmatpush1.msra.mxu0 0.0
    %130 = vmatprep.subr.mxu0 0.0
    %131 = vmatpush1.msra.mxu0 0.0
    %132 = vmatprep.subr.mxu0 0.0
    %133 = vmatpush1.msra.mxu0 0.0
    %134 = vmatprep.subr.mxu0 0.0
    %135 = vmatpush1.msra.mxu0 0.0
    %136 = vmatprep.subr.mxu0 0.0
    %137 = vmatpush1.msra.mxu0 0.0
    %138 = vmatprep.mubr.f32.mxu0 0.0
    %139 = vmatmul.mubr.f32.gmra.mrb[0].mxu0 %v72
    %v140 = vpop.f32.mrb[0].mxu0
    %v141 = vadd.f32 0.0, %v140
    %v142 = vpop.f32.mrb[0].mxu0
    %143 = vdwg.mxu0
    %v145 = vsel %vm70, %v58, 0
    %147 = vmatprep.subr.mxu0 0.0
    %148 = vmatpush1.msra.mxu0 %v56
    %149 = vmatprep.subr.mxu0 0.0
    %150 = vmatpush1.msra.mxu0 0.0
    %151 = vmatprep.subr.mxu0 0.0
    %152 = vmatpush1.msra.mxu0 0.0
    %153 = vmatprep.subr.mxu0 0.0
    %154 = vmatpush1.msra.mxu0 0.0
    %155 = vmatprep.subr.mxu0 0.0
    %156 = vmatpush1.msra.mxu0 0.0
    %157 = vmatprep.subr.mxu0 0.0
    %158 = vmatpush1.msra.mxu0 0.0
    %159 = vmatprep.subr.mxu0 0.0
    %160 = vmatpush1.msra.mxu0 0.0
    %161 = vmatprep.subr.mxu0 0.0
    %162 = vmatpush1.msra.mxu0 0.0
    %163 = vmatprep.subr.mxu0 0.0
    %164 = vmatpush1.msra.mxu0 0.0
    %165 = vmatprep.subr.mxu0 0.0
    %166 = vmatpush1.msra.mxu0 0.0
    %167 = vmatprep.subr.mxu0 0.0
    %168 = vmatpush1.msra.mxu0 0.0
    %169 = vmatprep.subr.mxu0 0.0
    %170 = vmatpush1.msra.mxu0 0.0
    %171 = vmatprep.subr.mxu0 0.0
    %172 = vmatpush1.msra.mxu0 0.0
    %173 = vmatprep.subr.mxu0 0.0
    %174 = vmatpush1.msra.mxu0 0.0
    %175 = vmatprep.subr.mxu0 0.0
    %176 = vmatpush1.msra.mxu0 0.0
    %177 = vmatprep.subr.mxu0 0.0
    %178 = vmatpush1.msra.mxu0 0.0
    %179 = vmatprep.subr.mxu0 0.0
    %180 = vmatpush1.msra.mxu0 0.0
    %181 = vmatprep.subr.mxu0 0.0
    %182 = vmatpush1.msra.mxu0 0.0
    %183 = vmatprep.subr.mxu0 0.0
    %184 = vmatpush1.msra.mxu0 0.0
    %185 = vmatprep.subr.mxu0 0.0
    %186 = vmatpush1.msra.mxu0 0.0
    %187 = vmatprep.subr.mxu0 0.0
    %188 = vmatpush1.msra.mxu0 0.0
    %189 = vmatprep.subr.mxu0 0.0
    %190 = vmatpush1.msra.mxu0 0.0
    %191 = vmatprep.subr.mxu0 0.0
    %192 = vmatpush1.msra.mxu0 0.0
    %193 = vmatprep.subr.mxu0 0.0
    %194 = vmatpush1.msra.mxu0 0.0
    %195 = vmatprep.subr.mxu0 0.0
    %196 = vmatpush1.msra.mxu0 0.0
    %197 = vmatprep.subr.mxu0 0.0
    %198 = vmatpush1.msra.mxu0 0.0
    %199 = vmatprep.subr.mxu0 0.0
    %200 = vmatpush1.msra.mxu0 0.0
    %201 = vmatprep.subr.mxu0 0.0
    %202 = vmatpush1.msra.mxu0 0.0
    %203 = vmatprep.subr.mxu0 0.0
    %204 = vmatpush1.msra.mxu0 0.0
    %205 = vmatprep.subr.mxu0 0.0
    %206 = vmatpush1.msra.mxu0 0.0
    %207 = vmatprep.subr.mxu0 0.0
    %208 = vmatpush1.msra.mxu0 0.0
    %209 = vmatprep.subr.mxu0 0.0
    %210 = vmatpush1.msra.mxu0 0.0
    %211 = vmatprep.mubr.f32.mxu0 0.0
    %212 = vmatmul.mubr.f32.gmra.mrb[0].mxu0 %v145
    %v213 = vpop.f32.mrb[0].mxu0
    %v214 = vadd.f32 %v141, %v213
    %v215 = vpop.f32.mrb[0].mxu0
    %216 = vdwg.mxu0
    %s217 = scalar_lea.vmem [#allocation2], 16
    %v218 = vld [vmem:[%s217] sm:$0xff]
    %219 = vrot.lane.b32.xlu0 %v56, 126
    %v220 = vpop.permute.xlu0 %219
    %221 = vrot.lane.b32.xlu0 %v57, 126
    %v222 = vpop.permute.xlu0 %221
    %vm223 = vcmask 1031168
    %v224 = vsel %vm223, %v220, %v222
    %v227 = vsel %vm70, %v218, 0
    %229 = vmatprep.subr.mxu0 0.0
    %230 = vmatpush1.msra.mxu0 %v224
    %231 = vmatprep.subr.mxu0 0.0
    %232 = vmatpush1.msra.mxu0 0.0
    %233 = vmatprep.subr.mxu0 0.0
    %234 = vmatpush1.msra.mxu0 0.0
    %235 = vmatprep.subr.mxu0 0.0
    %236 = vmatpush1.msra.mxu0 0.0
    %237 = vmatprep.subr.mxu0 0.0
    %238 = vmatpush1.msra.mxu0 0.0
    %239 = vmatprep.subr.mxu0 0.0
    %240 = vmatpush1.msra.mxu0 0.0
    %241 = vmatprep.subr.mxu0 0.0
    %242 = vmatpush1.msra.mxu0 0.0
    %243 = vmatprep.subr.mxu0 0.0
    %244 = vmatpush1.msra.mxu0 0.0
    %245 = vmatprep.subr.mxu0 0.0
    %246 = vmatpush1.msra.mxu0 0.0
    %247 = vmatprep.subr.mxu0 0.0
    %248 = vmatpush1.msra.mxu0 0.0
    %249 = vmatprep.subr.mxu0 0.0
    %250 = vmatpush1.msra.mxu0 0.0
    %251 = vmatprep.subr.mxu0 0.0
    %252 = vmatpush1.msra.mxu0 0.0
    %253 = vmatprep.subr.mxu0 0.0
    %254 = vmatpush1.msra.mxu0 0.0
    %255 = vmatprep.subr.mxu0 0.0
    %256 = vmatpush1.msra.mxu0 0.0
    %257 = vmatprep.subr.mxu0 0.0
    %258 = vmatpush1.msra.mxu0 0.0
    %259 = vmatprep.subr.mxu0 0.0
    %260 = vmatpush1.msra.mxu0 0.0
    %261 = vmatprep.subr.mxu0 0.0
    %262 = vmatpush1.msra.mxu0 0.0
    %263 = vmatprep.subr.mxu0 0.0
    %264 = vmatpush1.msra.mxu0 0.0
    %265 = vmatprep.subr.mxu0 0.0
    %266 = vmatpush1.msra.mxu0 0.0
    %267 = vmatprep.subr.mxu0 0.0
    %268 = vmatpush1.msra.mxu0 0.0
    %269 = vmatprep.subr.mxu0 0.0
    %270 = vmatpush1.msra.mxu0 0.0
    %271 = vmatprep.subr.mxu0 0.0
    %272 = vmatpush1.msra.mxu0 0.0
    %273 = vmatprep.subr.mxu0 0.0
    %274 = vmatpush1.msra.mxu0 0.0
    %275 = vmatprep.subr.mxu0 0.0
    %276 = vmatpush1.msra.mxu0 0.0
    %277 = vmatprep.subr.mxu0 0.0
    %278 = vmatpush1.msra.mxu0 0.0
    %279 = vmatprep.subr.mxu0 0.0
    %280 = vmatpush1.msra.mxu0 0.0
    %281 = vmatprep.subr.mxu0 0.0
    %282 = vmatpush1.msra.mxu0 0.0
    %283 = vmatprep.subr.mxu0 0.0
    %284 = vmatpush1.msra.mxu0 0.0
    %285 = vmatprep.subr.mxu0 0.0
    %286 = vmatpush1.msra.mxu0 0.0
    %287 = vmatprep.subr.mxu0 0.0
    %288 = vmatpush1.msra.mxu0 0.0
    %289 = vmatprep.subr.mxu0 0.0
    %290 = vmatpush1.msra.mxu0 0.0
    %291 = vmatprep.subr.mxu0 0.0
    %292 = vmatpush1.msra.mxu0 0.0
    %293 = vmatprep.mubr.f32.mxu0 0.0
    %294 = vmatmul.mubr.f32.gmra.mrb[0].mxu0 %v227
    %v295 = vpop.f32.mrb[0].mxu0
    %v296 = vadd.f32 0.0, %v295
    %v297 = vpop.f32.mrb[0].mxu0
    %298 = vdwg.mxu0
    %v299 = vadd.f32 %v214, %v296
    %s300 = scalar_lea.vmem [#allocation2], 24
    %v301 = vld [vmem:[%s300] sm:$0xff]
    %302 = vrot.lane.b32.xlu0 %v56, 125
    %v303 = vpop.permute.xlu0 %302
    %304 = vrot.lane.b32.xlu0 %v57, 125
    %v305 = vpop.permute.xlu0 %304
    %vm306 = vcmask 1022976
    %v307 = vsel %vm306, %v303, %v305
    %v310 = vsel %vm70, %v301, 0
    %312 = vmatprep.subr.mxu0 0.0
    %313 = vmatpush1.msra.mxu0 %v307
    %314 = vmatprep.subr.mxu0 0.0
    %315 = vmatpush1.msra.mxu0 0.0
    %316 = vmatprep.subr.mxu0 0.0
    %317 = vmatpush1.msra.mxu0 0.0
    %318 = vmatprep.subr.mxu0 0.0
    %319 = vmatpush1.msra.mxu0 0.0
    %320 = vmatprep.subr.mxu0 0.0
    %321 = vmatpush1.msra.mxu0 0.0
    %322 = vmatprep.subr.mxu0 0.0
    %323 = vmatpush1.msra.mxu0 0.0
    %324 = vmatprep.subr.mxu0 0.0
    %325 = vmatpush1.msra.mxu0 0.0
    %326 = vmatprep.subr.mxu0 0.0
    %327 = vmatpush1.msra.mxu0 0.0
    %328 = vmatprep.subr.mxu0 0.0
    %329 = vmatpush1.msra.mxu0 0.0
    %330 = vmatprep.subr.mxu0 0.0
    %331 = vmatpush1.msra.mxu0 0.0
    %332 = vmatprep.subr.mxu0 0.0
    %333 = vmatpush1.msra.mxu0 0.0
    %334 = vmatprep.subr.mxu0 0.0
    %335 = vmatpush1.msra.mxu0 0.0
    %336 = vmatprep.subr.mxu0 0.0
    %337 = vmatpush1.msra.mxu0 0.0
    %338 = vmatprep.subr.mxu0 0.0
    %339 = vmatpush1.msra.mxu0 0.0
    %340 = vmatprep.subr.mxu0 0.0
    %341 = vmatpush1.msra.mxu0 0.0
    %342 = vmatprep.subr.mxu0 0.0
    %343 = vmatpush1.msra.mxu0 0.0
    %344 = vmatprep.subr.mxu0 0.0
    %345 = vmatpush1.msra.mxu0 0.0
    %346 = vmatprep.subr.mxu0 0.0
    %347 = vmatpush1.msra.mxu0 0.0
    %348 = vmatprep.subr.mxu0 0.0
    %349 = vmatpush1.msra.mxu0 0.0
    %350 = vmatprep.subr.mxu0 0.0
    %351 = vmatpush1.msra.mxu0 0.0
    %352 = vmatprep.subr.mxu0 0.0
    %353 = vmatpush1.msra.mxu0 0.0
    %354 = vmatprep.subr.mxu0 0.0
    %355 = vmatpush1.msra.mxu0 0.0
    %356 = vmatprep.subr.mxu0 0.0
    %357 = vmatpush1.msra.mxu0 0.0
    %358 = vmatprep.subr.mxu0 0.0
    %359 = vmatpush1.msra.mxu0 0.0
    %360 = vmatprep.subr.mxu0 0.0
    %361 = vmatpush1.msra.mxu0 0.0
    %362 = vmatprep.subr.mxu0 0.0
    %363 = vmatpush1.msra.mxu0 0.0
    %364 = vmatprep.subr.mxu0 0.0
    %365 = vmatpush1.msra.mxu0 0.0
    %366 = vmatprep.subr.mxu0 0.0
    %367 = vmatpush1.msra.mxu0 0.0
    %368 = vmatprep.subr.mxu0 0.0
    %369 = vmatpush1.msra.mxu0 0.0
    %370 = vmatprep.subr.mxu0 0.0
    %371 = vmatpush1.msra.mxu0 0.0
    %372 = vmatprep.subr.mxu0 0.0
    %373 = vmatpush1.msra.mxu0 0.0
    %374 = vmatprep.subr.mxu0 0.0
    %375 = vmatpush1.msra.mxu0 0.0
    %376 = vmatprep.mubr.f32.mxu0 0.0
    %377 = vmatmul.mubr.f32.gmra.mrb[0].mxu0 %v310
    %v378 = vpop.f32.mrb[0].mxu0
    %v379 = vadd.f32 0.0, %v378
    %v380 = vpop.f32.mrb[0].mxu0
    %381 = vdwg.mxu0
    %v382 = vadd.f32 %v299, %v379
    %s383 = scalar_lea.vmem [#allocation2], 32
    %v384 = vld [vmem:[%s383] sm:$0xff]
    %385 = vrot.lane.b32.xlu0 %v56, 124
    %v386 = vpop.permute.xlu0 %385
    %387 = vrot.lane.b32.xlu0 %v57, 124
    %v388 = vpop.permute.xlu0 %387
    %vm389 = vcmask 1014784
    %v390 = vsel %vm389, %v386, %v388
    %v393 = vsel %vm70, %v384, 0
    %395 = vmatprep.subr.mxu0 0.0
    %396 = vmatpush1.msra.mxu0 %v390
    %397 = vmatprep.subr.mxu0 0.0
    %398 = vmatpush1.msra.mxu0 0.0
    %399 = vmatprep.subr.mxu0 0.0
    %400 = vmatpush1.msra.mxu0 0.0
    %401 = vmatprep.subr.mxu0 0.0
    %402 = vmatpush1.msra.mxu0 0.0
    %403 = vmatprep.subr.mxu0 0.0
    %404 = vmatpush1.msra.mxu0 0.0
    %405 = vmatprep.subr.mxu0 0.0
    %406 = vmatpush1.msra.mxu0 0.0
    %407 = vmatprep.subr.mxu0 0.0
    %408 = vmatpush1.msra.mxu0 0.0
    %409 = vmatprep.subr.mxu0 0.0
    %410 = vmatpush1.msra.mxu0 0.0
    %411 = vmatprep.subr.mxu0 0.0
    %412 = vmatpush1.msra.mxu0 0.0
    %413 = vmatprep.subr.mxu0 0.0
    %414 = vmatpush1.msra.mxu0 0.0
    %415 = vmatprep.subr.mxu0 0.0
    %416 = vmatpush1.msra.mxu0 0.0
    %417 = vmatprep.subr.mxu0 0.0
    %418 = vmatpush1.msra.mxu0 0.0
    %419 = vmatprep.subr.mxu0 0.0
    %420 = vmatpush1.msra.mxu0 0.0
    %421 = vmatprep.subr.mxu0 0.0
    %422 = vmatpush1.msra.mxu0 0.0
    %423 = vmatprep.subr.mxu0 0.0
    %424 = vmatpush1.msra.mxu0 0.0
    %425 = vmatprep.subr.mxu0 0.0
    %426 = vmatpush1.msra.mxu0 0.0
    %427 = vmatprep.subr.mxu0 0.0
    %428 = vmatpush1.msra.mxu0 0.0
    %429 = vmatprep.subr.mxu0 0.0
    %430 = vmatpush1.msra.mxu0 0.0
    %431 = vmatprep.subr.mxu0 0.0
    %432 = vmatpush1.msra.mxu0 0.0
    %433 = vmatprep.subr.mxu0 0.0
    %434 = vmatpush1.msra.mxu0 0.0
    %435 = vmatprep.subr.mxu0 0.0
    %436 = vmatpush1.msra.mxu0 0.0
    %437 = vmatprep.subr.mxu0 0.0
    %438 = vmatpush1.msra.mxu0 0.0
    %439 = vmatprep.subr.mxu0 0.0
    %440 = vmatpush1.msra.mxu0 0.0
    %441 = vmatprep.subr.mxu0 0.0
    %442 = vmatpush1.msra.mxu0 0.0
    %443 = vmatprep.subr.mxu0 0.0
    %444 = vmatpush1.msra.mxu0 0.0
    %445 = vmatprep.subr.mxu0 0.0
    %446 = vmatpush1.msra.mxu0 0.0
    %447 = vmatprep.subr.mxu0 0.0
    %448 = vmatpush1.msra.mxu0 0.0
    %449 = vmatprep.subr.mxu0 0.0
    %450 = vmatpush1.msra.mxu0 0.0
    %451 = vmatprep.subr.mxu0 0.0
    %452 = vmatpush1.msra.mxu0 0.0
    %453 = vmatprep.subr.mxu0 0.0
    %454 = vmatpush1.msra.mxu0 0.0
    %455 = vmatprep.subr.mxu0 0.0
    %456 = vmatpush1.msra.mxu0 0.0
    %457 = vmatprep.subr.mxu0 0.0
    %458 = vmatpush1.msra.mxu0 0.0
    %459 = vmatprep.mubr.f32.mxu0 0.0
    %460 = vmatmul.mubr.f32.gmra.mrb[0].mxu0 %v393
    %v461 = vpop.f32.mrb[0].mxu0
    %v462 = vadd.f32 0.0, %v461
    %v463 = vpop.f32.mrb[0].mxu0
    %464 = vdwg.mxu0
    %v465 = vadd.f32 %v382, %v462
    %s466 = scalar_lea.vmem [#allocation2], 40
    %v467 = vld [vmem:[%s466] sm:$0xff]
    %468 = vrot.lane.b32.xlu0 %v56, 123
    %v469 = vpop.permute.xlu0 %468
    %470 = vrot.lane.b32.xlu0 %v57, 123
    %v471 = vpop.permute.xlu0 %470
    %vm472 = vcmask 1006592
    %v473 = vsel %vm472, %v469, %v471
    %v476 = vsel %vm70, %v467, 0
    %478 = vmatprep.subr.mxu0 0.0
    %479 = vmatpush1.msra.mxu0 %v473
    %480 = vmatprep.subr.mxu0 0.0
    %481 = vmatpush1.msra.mxu0 0.0
    %482 = vmatprep.subr.mxu0 0.0
    %483 = vmatpush1.msra.mxu0 0.0
    %484 = vmatprep.subr.mxu0 0.0
    %485 = vmatpush1.msra.mxu0 0.0
    %486 = vmatprep.subr.mxu0 0.0
    %487 = vmatpush1.msra.mxu0 0.0
    %488 = vmatprep.subr.mxu0 0.0
    %489 = vmatpush1.msra.mxu0 0.0
    %490 = vmatprep.subr.mxu0 0.0
    %491 = vmatpush1.msra.mxu0 0.0
    %492 = vmatprep.subr.mxu0 0.0
    %493 = vmatpush1.msra.mxu0 0.0
    %494 = vmatprep.subr.mxu0 0.0
    %495 = vmatpush1.msra.mxu0 0.0
    %496 = vmatprep.subr.mxu0 0.0
    %497 = vmatpush1.msra.mxu0 0.0
    %498 = vmatprep.subr.mxu0 0.0
    %499 = vmatpush1.msra.mxu0 0.0
    %500 = vmatprep.subr.mxu0 0.0
    %501 = vmatpush1.msra.mxu0 0.0
    %502 = vmatprep.subr.mxu0 0.0
    %503 = vmatpush1.msra.mxu0 0.0
    %504 = vmatprep.subr.mxu0 0.0
    %505 = vmatpush1.msra.mxu0 0.0
    %506 = vmatprep.subr.mxu0 0.0
    %507 = vmatpush1.msra.mxu0 0.0
    %508 = vmatprep.subr.mxu0 0.0
    %509 = vmatpush1.msra.mxu0 0.0
    %510 = vmatprep.subr.mxu0 0.0
    %511 = vmatpush1.msra.mxu0 0.0
    %512 = vmatprep.subr.mxu0 0.0
    %513 = vmatpush1.msra.mxu0 0.0
    %514 = vmatprep.subr.mxu0 0.0
    %515 = vmatpush1.msra.mxu0 0.0
    %516 = vmatprep.subr.mxu0 0.0
    %517 = vmatpush1.msra.mxu0 0.0
    %518 = vmatprep.subr.mxu0 0.0
    %519 = vmatpush1.msra.mxu0 0.0
    %520 = vmatprep.subr.mxu0 0.0
    %521 = vmatpush1.msra.mxu0 0.0
    %522 = vmatprep.subr.mxu0 0.0
    %523 = vmatpush1.msra.mxu0 0.0
    %524 = vmatprep.subr.mxu0 0.0
    %525 = vmatpush1.msra.mxu0 0.0
    %526 = vmatprep.subr.mxu0 0.0
    %527 = vmatpush1.msra.mxu0 0.0
    %528 = vmatprep.subr.mxu0 0.0
    %529 = vmatpush1.msra.mxu0 0.0
    %530 = vmatprep.subr.mxu0 0.0
    %531 = vmatpush1.msra.mxu0 0.0
    %532 = vmatprep.subr.mxu0 0.0
    %533 = vmatpush1.msra.mxu0 0.0
    %534 = vmatprep.subr.mxu0 0.0
    %535 = vmatpush1.msra.mxu0 0.0
    %536 = vmatprep.subr.mxu0 0.0
    %537 = vmatpush1.msra.mxu0 0.0
    %538 = vmatprep.subr.mxu0 0.0
    %539 = vmatpush1.msra.mxu0 0.0
    %540 = vmatprep.subr.mxu0 0.0
    %541 = vmatpush1.msra.mxu0 0.0
    %542 = vmatprep.mubr.f32.mxu0 0.0
    %543 = vmatmul.mubr.f32.gmra.mrb[0].mxu0 %v476
    %v544 = vpop.f32.mrb[0].mxu0
    %v545 = vadd.f32 0.0, %v544
    %v546 = vpop.f32.mrb[0].mxu0
    %547 = vdwg.mxu0
    %v548 = vadd.f32 %v465, %v545
    %s549 = scalar_lea.vmem [#allocation2], 48
    %v550 = vld [vmem:[%s549] sm:$0xff]
    %551 = vrot.lane.b32.xlu0 %v56, 122
    %v552 = vpop.permute.xlu0 %551
    %553 = vrot.lane.b32.xlu0 %v57, 122
    %v554 = vpop.permute.xlu0 %553
    %vm555 = vcmask 998400
    %v556 = vsel %vm555, %v552, %v554
    %v559 = vsel %vm70, %v550, 0
    %561 = vmatprep.subr.mxu0 0.0
    %562 = vmatpush1.msra.mxu0 %v556
    %563 = vmatprep.subr.mxu0 0.0
    %564 = vmatpush1.msra.mxu0 0.0
    %565 = vmatprep.subr.mxu0 0.0
    %566 = vmatpush1.msra.mxu0 0.0
    %567 = vmatprep.subr.mxu0 0.0
    %568 = vmatpush1.msra.mxu0 0.0
    %569 = vmatprep.subr.mxu0 0.0
    %570 = vmatpush1.msra.mxu0 0.0
    %571 = vmatprep.subr.mxu0 0.0
    %572 = vmatpush1.msra.mxu0 0.0
    %573 = vmatprep.subr.mxu0 0.0
    %574 = vmatpush1.msra.mxu0 0.0
    %575 = vmatprep.subr.mxu0 0.0
    %576 = vmatpush1.msra.mxu0 0.0
    %577 = vmatprep.subr.mxu0 0.0
    %578 = vmatpush1.msra.mxu0 0.0
    %579 = vmatprep.subr.mxu0 0.0
    %580 = vmatpush1.msra.mxu0 0.0
    %581 = vmatprep.subr.mxu0 0.0
    %582 = vmatpush1.msra.mxu0 0.0
    %583 = vmatprep.subr.mxu0 0.0
    %584 = vmatpush1.msra.mxu0 0.0
    %585 = vmatprep.subr.mxu0 0.0
    %586 = vmatpush1.msra.mxu0 0.0
    %587 = vmatprep.subr.mxu0 0.0
    %588 = vmatpush1.msra.mxu0 0.0
    %589 = vmatprep.subr.mxu0 0.0
    %590 = vmatpush1.msra.mxu0 0.0
    %591 = vmatprep.subr.mxu0 0.0
    %592 = vmatpush1.msra.mxu0 0.0
    %593 = vmatprep.subr.mxu0 0.0
    %594 = vmatpush1.msra.mxu0 0.0
    %595 = vmatprep.subr.mxu0 0.0
    %596 = vmatpush1.msra.mxu0 0.0
    %597 = vmatprep.subr.mxu0 0.0
    %598 = vmatpush1.msra.mxu0 0.0
    %599 = vmatprep.subr.mxu0 0.0
    %600 = vmatpush1.msra.mxu0 0.0
    %601 = vmatprep.subr.mxu0 0.0
    %602 = vmatpush1.msra.mxu0 0.0
    %603 = vmatprep.subr.mxu0 0.0
    %604 = vmatpush1.msra.mxu0 0.0
    %605 = vmatprep.subr.mxu0 0.0
    %606 = vmatpush1.msra.mxu0 0.0
    %607 = vmatprep.subr.mxu0 0.0
    %608 = vmatpush1.msra.mxu0 0.0
    %609 = vmatprep.subr.mxu0 0.0
    %610 = vmatpush1.msra.mxu0 0.0
    %611 = vmatprep.subr.mxu0 0.0
    %612 = vmatpush1.msra.mxu0 0.0
    %613 = vmatprep.subr.mxu0 0.0
    %614 = vmatpush1.msra.mxu0 0.0
    %615 = vmatprep.subr.mxu0 0.0
    %616 = vmatpush1.msra.mxu0 0.0
    %617 = vmatprep.subr.mxu0 0.0
    %618 = vmatpush1.msra.mxu0 0.0
    %619 = vmatprep.subr.mxu0 0.0
    %620 = vmatpush1.msra.mxu0 0.0
    %621 = vmatprep.subr.mxu0 0.0
    %622 = vmatpush1.msra.mxu0 0.0
    %623 = vmatprep.subr.mxu0 0.0
    %624 = vmatpush1.msra.mxu0 0.0
    %625 = vmatprep.mubr.f32.mxu0 0.0
    %626 = vmatmul.mubr.f32.gmra.mrb[0].mxu0 %v559
    %v627 = vpop.f32.mrb[0].mxu0
    %v628 = vadd.f32 0.0, %v627
    %v629 = vpop.f32.mrb[0].mxu0
    %630 = vdwg.mxu0
    %v631 = vadd.f32 %v548, %v628
    %s632 = scalar_lea.vmem [#allocation2], 56
    %v633 = vld [vmem:[%s632] sm:$0xff]
    %634 = vrot.lane.b32.xlu0 %v56, 121
    %v635 = vpop.permute.xlu0 %634
    %636 = vrot.lane.b32.xlu0 %v57, 121
    %v637 = vpop.permute.xlu0 %636
    %vm638 = vcmask 990208
    %v639 = vsel %vm638, %v635, %v637
    %v642 = vsel %vm70, %v633, 0
    %644 = vmatprep.subr.mxu0 0.0
    %645 = vmatpush1.msra.mxu0 %v639
    %646 = vmatprep.subr.mxu0 0.0
    %647 = vmatpush1.msra.mxu0 0.0
    %648 = vmatprep.subr.mxu0 0.0
    %649 = vmatpush1.msra.mxu0 0.0
    %650 = vmatprep.subr.mxu0 0.0
    %651 = vmatpush1.msra.mxu0 0.0
    %652 = vmatprep.subr.mxu0 0.0
    %653 = vmatpush1.msra.mxu0 0.0
    %654 = vmatprep.subr.mxu0 0.0
    %655 = vmatpush1.msra.mxu0 0.0
    %656 = vmatprep.subr.mxu0 0.0
    %657 = vmatpush1.msra.mxu0 0.0
    %658 = vmatprep.subr.mxu0 0.0
    %659 = vmatpush1.msra.mxu0 0.0
    %660 = vmatprep.subr.mxu0 0.0
    %661 = vmatpush1.msra.mxu0 0.0
    %662 = vmatprep.subr.mxu0 0.0
    %663 = vmatpush1.msra.mxu0 0.0
    %664 = vmatprep.subr.mxu0 0.0
    %665 = vmatpush1.msra.mxu0 0.0
    %666 = vmatprep.subr.mxu0 0.0
    %667 = vmatpush1.msra.mxu0 0.0
    %668 = vmatprep.subr.mxu0 0.0
    %669 = vmatpush1.msra.mxu0 0.0
    %670 = vmatprep.subr.mxu0 0.0
    %671 = vmatpush1.msra.mxu0 0.0
    %672 = vmatprep.subr.mxu0 0.0
    %673 = vmatpush1.msra.mxu0 0.0
    %674 = vmatprep.subr.mxu0 0.0
    %675 = vmatpush1.msra.mxu0 0.0
    %676 = vmatprep.subr.mxu0 0.0
    %677 = vmatpush1.msra.mxu0 0.0
    %678 = vmatprep.subr.mxu0 0.0
    %679 = vmatpush1.msra.mxu0 0.0
    %680 = vmatprep.subr.mxu0 0.0
    %681 = vmatpush1.msra.mxu0 0.0
    %682 = vmatprep.subr.mxu0 0.0
    %683 = vmatpush1.msra.mxu0 0.0
    %684 = vmatprep.subr.mxu0 0.0
    %685 = vmatpush1.msra.mxu0 0.0
    %686 = vmatprep.subr.mxu0 0.0
    %687 = vmatpush1.msra.mxu0 0.0
    %688 = vmatprep.subr.mxu0 0.0
    %689 = vmatpush1.msra.mxu0 0.0
    %690 = vmatprep.subr.mxu0 0.0
    %691 = vmatpush1.msra.mxu0 0.0
    %692 = vmatprep.subr.mxu0 0.0
    %693 = vmatpush1.msra.mxu0 0.0
    %694 = vmatprep.subr.mxu0 0.0
    %695 = vmatpush1.msra.mxu0 0.0
    %696 = vmatprep.subr.mxu0 0.0
    %697 = vmatpush1.msra.mxu0 0.0
    %698 = vmatprep.subr.mxu0 0.0
    %699 = vmatpush1.msra.mxu0 0.0
    %700 = vmatprep.subr.mxu0 0.0
    %701 = vmatpush1.msra.mxu0 0.0
    %702 = vmatprep.subr.mxu0 0.0
    %703 = vmatpush1.msra.mxu0 0.0
    %704 = vmatprep.subr.mxu0 0.0
    %705 = vmatpush1.msra.mxu0 0.0
    %706 = vmatprep.subr.mxu0 0.0
    %707 = vmatpush1.msra.mxu0 0.0
    %708 = vmatprep.mubr.f32.mxu0 0.0
    %709 = vmatmul.mubr.f32.gmra.mrb[0].mxu0 %v642
    %v710 = vpop.f32.mrb[0].mxu0
    %v711 = vadd.f32 0.0, %v710
    %v712 = vpop.f32.mrb[0].mxu0
    %713 = vdwg.mxu0
    %v714 = vadd.f32 %v631, %v711
    %715 = vst [vmem:[#allocation8] sm:$0xff] %v714
    // Predicated region
    $region26: #{tpu_custom_call.1} parent=1 // pred_check
      _
    $region27: #{tpu_custom_call.1} parent=1 // pred_check_branch
      %717 = sbr.rel (0) target = $region29
    $region28: #{tpu_custom_call.1} parent=1 // pred_region
      %s719 = ssub.s32 128, 128
      %720 = vsyncadd [#allocation4], %s719
      %s722 = sshll.u32 [#allocation8], 4
      %s723 = int_to_ptr.vmem [resolvable:$true] %s722
      %725 = dma.vmem_to_hbm [thread:$0]  %s723, 128, %s3, [#allocation4]
    $region29: #{tpu_custom_call.1} parent=1 // pred_fallthru
      _
    // Predicated region
    $region30: #{tpu_custom_call.1} parent=1 // pred_check
      _
    $region31: #{tpu_custom_call.1} parent=1 // pred_check_branch
      %727 = sbr.rel (0) target = $region33
    $region32: #{tpu_custom_call.1} parent=1 // pred_region
      %728 = dma.done [#allocation4], 128
    $region33: #{tpu_custom_call.1} parent=1 // pred_fallthru
      _
    %729 = vsyncpa [#allocation3], 1
    %730 = vsyncpa [#allocation6], 1
    %731 = vsyncpa [#allocation4], 1

</llo_original>
